<compile_context>
chip_gen: v7x
topology: tpu7x:2x2x1
jax: 0.10.0
libtpu: 0.0.40
codegen_flags: <defaults>
</compile_context>

<pallas_src>
import functools

import jax
import jax.numpy as jnp
from jax.experimental import pallas as pl
from jax.experimental.pallas import tpu as pltpu


# ----------------------------------------------------------------------------
# Pallas kernel: barycentric interpolation of pre-gathered per-face attributes
# ----------------------------------------------------------------------------
def _interp_kernel(flags_ref, table_ref, pix_ref, bary_ref, o_ref, *, F, C_pad):
    """Per (batch, pixel-tile) grid point.

      flags_ref: (B, n_p) int32 in SMEM (scalar prefetch) -- tile has foreground
      table_ref: (1, 3*C_pad, F_pad) f32 -- corner-major culled attribute table
      pix_ref  : (1, 1, Tp)  int32       -- packed face index or -1 (background)
      bary_ref : (1, 3, Tp)  f32
      o_ref    : (1, C_pad, Tp) f32
    """
    b = pl.program_id(0)
    p = pl.program_id(1)
    F_pad = table_ref.shape[2]
    Tp = pix_ref.shape[2]

    has_fg = flags_ref[b, p] != 0

    @pl.when(jnp.logical_not(has_fg))
    def _():
        # Background-only (or pure padding) tile: skip one-hot + matmul.
        o_ref[...] = jnp.zeros_like(o_ref)

    @pl.when(has_fg)
    def _():
        # Faces of mesh b occupy packed indices [b*F, (b+1)*F).  Background
        # pixels carry -1 -> pix_local < 0 matches no iota row -> all-zero
        # one-hot column -> zero output (no extra masking needed).  Padded
        # table columns [F, F_pad) likewise never match.
        pix_local = pix_ref[0] - b * F                                     # (1, Tp)
        f_iota = jax.lax.broadcasted_iota(jnp.int32, (F_pad, Tp), 0)
        onehot = (pix_local == f_iota).astype(jnp.float32)                 # (F_pad, Tp)

        # One MXU matmul gathers all three corners at once (M = 3*C_pad rows).
        G = jnp.dot(table_ref[0], onehot,
                    preferred_element_type=jnp.float32)                    # (3*C_pad, Tp)
        bary = bary_ref[0]                                                 # (3, Tp)
        acc = (bary[0:1, :] * G[0:C_pad, :]
               + bary[1:2, :] * G[C_pad:2 * C_pad, :]
               + bary[2:3, :] * G[2 * C_pad:3 * C_pad, :])                 # (C_pad, Tp)
        o_ref[0] = acc.astype(o_ref.dtype)


# ----------------------------------------------------------------------------
# Host-side glue
# ----------------------------------------------------------------------------
def _vmem_capacity_bytes():
    """Physical VMEM capacity; conservative fallback if the query is unavailable."""
    try:
        cap = int(pltpu.get_tpu_info().vmem_capacity_bytes)
        if cap > 0:
            return cap
    except Exception:
        pass
    return 64 * 1024 * 1024  # assume the smallest (v7x-like) envelope


def _pick_p_tile(P, max_tile, p_tile=None):
    """Pixel tile (multiple of 128) and padded pixel count (multiple of tile)."""
    if p_tile is not None:
        Tp = max(128, (int(p_tile) // 128) * 128)
    else:
        Tp = min(max_tile, max(128, -(-P // 128) * 128))
    P_pad = -(-P // Tp) * Tp
    return Tp, P_pad


def _build_face_table(vert_attr, vert, faces, cull, C_pad, F_pad):
    """XLA pre-pass: gather per-face corner attributes, backface-cull, and lay
    out as (B, 3*C_pad, F_pad) -- corners/channels in sublanes, faces in lanes."""
    B, V, C = vert_attr.shape
    F = faces.shape[0]
    fa = jnp.take(vert_attr.astype(jnp.float32), faces, axis=1)      # (B, F, 3, C)
    if cull:
        fv = jnp.take(vert.astype(jnp.float32)[..., :2], faces, axis=1)  # (B, F, 3, 2)
        v0, v1, v2 = fv[:, :, 0], fv[:, :, 1], fv[:, :, 2]
        areas = (v0[..., 0] - v1[..., 0]) * (v2[..., 1] - v1[..., 1]) \
              - (v0[..., 1] - v1[..., 1]) * (v2[..., 0] - v1[..., 0])    # (B, F)
        fa = jnp.where((areas <= 0)[:, :, None, None], 0.0, fa)
    table = fa.transpose(0, 2, 3, 1)                                  # (B, 3, C, F)
    table = jnp.pad(table, ((0, 0), (0, 0), (0, C_pad - C), (0, F_pad - F)))
    return table.reshape(B, 3 * C_pad, F_pad)


def attr2uv_forward(vert_attr, vert, faces, pix_to_face, bary_coords, size,
                    cull=True, p_tile=None):
    """Pallas implementation of Attr2Uv.forward. Returns (B, C, size, size)."""
    B, V, C = vert_attr.shape
    F = faces.shape[0]
    H = W = size
    P = H * W

    # --- hardware-aware tiling -------------------------------------------------
    vmem_cap = _vmem_capacity_bytes()
    max_tile = 2048 if vmem_cap >= 96 * 1024 * 1024 else 1024   # smaller Tp on 64 MiB VMEM
    vmem_limit = min(int(vmem_cap * 3 // 4), 100 * 1024 * 1024)
    Tp, P_pad = _pick_p_tile(P, max_tile, p_tile)
    n_p = P_pad // Tp
    C_pad = -(-C // 8) * 8
    F_pad = max(128, -(-F // 128) * 128)

    # --- pre-pass: gather + cull (small F*3*C work, plain XLA gather) ----------
    table = _build_face_table(vert_attr, vert, faces, cull, C_pad, F_pad)  # (B, 3*C_pad, F_pad)

    # --- layout glue: small dims into sublanes, P into lanes; pad P ------------
    pix = pix_to_face.astype(jnp.int32).reshape(B, 1, P)                           # (B, 1, P)
    bary_t = bary_coords.astype(jnp.float32).reshape(B, P, 3).transpose(0, 2, 1)   # (B, 3, P)
    if P_pad != P:
        pix = jnp.pad(pix, ((0, 0), (0, 0), (0, P_pad - P)), constant_values=-1)
        bary_t = jnp.pad(bary_t, ((0, 0), (0, 0), (0, P_pad - P)))

    # scalar-prefetch flags: does tile (b, p) contain any foreground pixel?
    flags = (pix.reshape(B, n_p, Tp) >= 0).any(axis=-1).astype(jnp.int32)          # (B, n_p)

    kernel = functools.partial(_interp_kernel, F=F, C_pad=C_pad)
    out = pl.pallas_call(
        kernel,
        out_shape=jax.ShapeDtypeStruct((B, C_pad, P_pad), jnp.float32),
        grid_spec=pltpu.PrefetchScalarGridSpec(
            num_scalar_prefetch=1,
            grid=(B, n_p),
            in_specs=[
                # culled attr table: revisited (DMA'd once per batch)
                pl.BlockSpec((1, 3 * C_pad, F_pad), lambda b, p, flags: (b, 0, 0)),
                pl.BlockSpec((1, 1, Tp), lambda b, p, flags: (b, 0, p)),
                pl.BlockSpec((1, 3, Tp), lambda b, p, flags: (b, 0, p)),
            ],
            out_specs=pl.BlockSpec((1, C_pad, Tp), lambda b, p, flags: (b, 0, p)),
        ),
        compiler_params=pltpu.CompilerParams(
            # no scratch carry anymore -> both axes independent; v7x megacore can
            # split pixel tiles as well as batches.
            dimension_semantics=("parallel", "parallel"),
            vmem_limit_bytes=vmem_limit,
        ),
    )(flags, table, pix, bary_t)

    # glue: drop channel/pixel padding; (B, C, P) is channel-major so the
    # reshape gives NCHW directly (mirrors `.squeeze(3).permute(0, 3, 1, 2)`).
    return out[:, :C, :P].reshape(B, C, H, W)


# ----------------------------------------------------------------------------
# Pure-JAX reference matching the PyTorch forward semantics
# ----------------------------------------------------------------------------
def attr2uv_reference(vert_attr, vert, faces, pix_to_face, bary_coords, size, cull=True):
    B, V, C = vert_attr.shape
    F = faces.shape[0]
    H = W = size
    faces_packed = (faces[None].astype(jnp.int32)
                    + (jnp.arange(B, dtype=jnp.int32) * V)[:, None, None]).reshape(-1, 3)
    attr_packed = vert_attr.reshape(-1, C)
    faces_attrs = attr_packed[faces_packed]                       # (B*F, 3, C)
    if cull:
        vert_packed = vert.reshape(-1, 3)
        fv = vert_packed[faces_packed]                            # (B*F, 3, 3)
        v0, v1, v2 = fv[:, 0], fv[:, 1], fv[:, 2]
        areas = (v0[:, 0] - v1[:, 0]) * (v2[:, 1] - v1[:, 1]) \
              - (v0[:, 1] - v1[:, 1]) * (v2[:, 0] - v1[:, 0])
        faces_attrs = jnp.where((areas <= 0)[:, None, None], 0.0, faces_attrs)
    p2f = pix_to_face.reshape(B, H, W)
    bary = bary_coords.reshape(B, H, W, 3)
    gathered = faces_attrs[jnp.maximum(p2f, 0)]                   # (B, H, W, 3, C)
    uv = jnp.einsum('bhwi,bhwic->bhwc', bary, gathered)
    uv = jnp.where((p2f >= 0)[..., None], uv, 0.0)
    return uv.transpose(0, 3, 1, 2)


if __name__ == "__main__":
    key = jax.random.PRNGKey(0)
    B, V, F, C, size = 2, 32, 64, 4, 16
    H = W = size
    k1, k2, k3, k4, k5, k6 = jax.random.split(key, 6)

    # deterministic synthetic mesh + inputs
    faces = jax.random.randint(k1, (F, 3), 0, V, dtype=jnp.int32)
    vert_attr = jax.random.normal(k2, (B, V, C), dtype=jnp.float32)
    vert = jax.random.normal(k3, (B, V, 3), dtype=jnp.float32)

    # synthetic rasterization products (normally produced in __init__ by
    # pytorch3d rasterize_meshes): pix_to_face holds packed face indices for
    # mesh b (values in [b*F, (b+1)*F)) or -1 for background pixels.
    local_face = jax.random.randint(k4, (B, H, W, 1), 0, F, dtype=jnp.int32)
    background = jax.random.uniform(k5, (B, H, W, 1)) < 0.25
    pix_to_face = jnp.where(
        background, -1,
        local_face + (jnp.arange(B, dtype=jnp.int32) * F)[:, None, None, None])
    # force an all-background region (batch 0, bottom half) so that one pixel
    # tile exercises the scalar-prefetch "skip background tile" path.
    pix_to_face = pix_to_face.at[0, H // 2:, :, :].set(-1)
    bary_raw = jax.random.uniform(k6, (B, H, W, 1, 3), dtype=jnp.float32) + 1e-3
    bary_coords = bary_raw / bary_raw.sum(axis=-1, keepdims=True)

    out = attr2uv_forward(vert_attr, vert, faces, pix_to_face, bary_coords, size,
                          cull=True, p_tile=128)   # p_tile=128 -> 2 tiles/batch
    out = jax.block_until_ready(out)

    ref = attr2uv_reference(vert_attr, vert, faces, pix_to_face, bary_coords, size, cull=True)
    assert out.shape == (B, C, H, W), out.shape
    if not jnp.allclose(out, ref, atol=1e-4, rtol=1e-4):
        raise AssertionError("Pallas kernel output mismatch vs JAX reference")
    print("KERNEL_OK")
</pallas_src>

<mosaic_0001>
module attributes {stable_mosaic.version = 11 : i64} {
  func.func @_interp_kernel(%arg0: i32, %arg1: i32, %arg2: memref<2x2xi32, #tpu.memory_space<smem>>, %arg3: memref<1x24x128xf32, #tpu.memory_space<vmem>>, %arg4: memref<1x1x128xi32, #tpu.memory_space<vmem>>, %arg5: memref<1x3x128xf32, #tpu.memory_space<vmem>>, %arg6: memref<1x8x128xf32, #tpu.memory_space<vmem>>) attributes {dimension_semantics = [#tpu.dimension_semantics<parallel>, #tpu.dimension_semantics<parallel>], iteration_bounds = array<i64: 2, 2>, scalar_prefetch = 1 : i64, scratch_operands = 0 : i64, tpu.core_type = #tpu.core_type<tc>, window_params = [{transform_indices = @transform_0, window_bounds = array<i64: 1, 24, 128>}, {transform_indices = @transform_1, window_bounds = array<i64: 1, 1, 128>}, {transform_indices = @transform_2, window_bounds = array<i64: 1, 3, 128>}, {transform_indices = @transform_3, window_bounds = array<i64: 1, 8, 128>}]} {
    %0 = arith.index_cast %arg0 : i32 to index
    %1 = arith.index_cast %arg1 : i32 to index
    %2 = memref.load %arg2[%0, %1] : memref<2x2xi32, #tpu.memory_space<smem>>
    %c0_i32 = arith.constant 0 : i32
    %3 = arith.cmpi ne, %2, %c0_i32 : i32
    %true = arith.constant true
    %4 = arith.xori %3, %true : i1
    %5 = arith.extui %4 : i1 to i32
    %c0_i32_0 = arith.constant 0 : i32
    %6 = arith.cmpi ne, %5, %c0_i32_0 : i32
    scf.if %6 {
      %cst = arith.constant 0.000000e+00 : f32
      %9 = vector.broadcast %cst : f32 to vector<1x8x128xf32>
      %c0 = arith.constant 0 : index
      %c0_2 = arith.constant 0 : index
      %c0_3 = arith.constant 0 : index
      %10 = vector.load %arg6[%c0, %c0_2, %c0_3] : memref<1x8x128xf32, #tpu.memory_space<vmem>>, vector<1x8x128xf32>
      tpu.vector_store %arg6[%c0, %c0_2, %c0_3], %9 {strides = array<i32>} : memref<1x8x128xf32, #tpu.memory_space<vmem>>, vector<1x8x128xf32>,
    } else {
    }
    %7 = arith.extui %3 : i1 to i32
    %c0_i32_1 = arith.constant 0 : i32
    %8 = arith.cmpi ne, %7, %c0_i32_1 : i32
    scf.if %8 {
      %c0 = arith.constant 0 : index
      %c0_2 = arith.constant 0 : index
      %c0_3 = arith.constant 0 : index
      %9 = vector.load %arg4[%c0, %c0_2, %c0_3] : memref<1x1x128xi32, #tpu.memory_space<vmem>>, vector<1x1x128xi32>
      %10 = vector.shape_cast %9 : vector<1x1x128xi32> to vector<1x128xi32>
      %c64_i32 = arith.constant 64 : i32
      %11 = arith.muli %arg0, %c64_i32 : i32
      %12 = vector.broadcast %11 : i32 to vector<1x128xi32>
      %13 = arith.subi %10, %12 : vector<1x128xi32>
      %14 = tpu.iota {dimensions = array<i32: 0>} : vector<128x128xi32>
      %15 = vector.broadcast %13 : vector<1x128xi32> to vector<128x128xi32>
      %16 = arith.cmpi eq, %15, %14 : vector<128x128xi32>
      %17 = arith.extui %16 : vector<128x128xi1> to vector<128x128xi32>
      %18 = arith.sitofp %17 : vector<128x128xi32> to vector<128x128xf32>
      %c0_4 = arith.constant 0 : index
      %c0_5 = arith.constant 0 : index
      %c0_6 = arith.constant 0 : index
      %19 = vector.load %arg3[%c0_4, %c0_5, %c0_6] : memref<1x24x128xf32, #tpu.memory_space<vmem>>, vector<1x24x128xf32>
      %20 = vector.shape_cast %19 : vector<1x24x128xf32> to vector<24x128xf32>
      %cst = arith.constant dense<0.000000e+00> : vector<24x128xf32>
      %21 = tpu.matmul %20, %18, %cst {dimension_numbers = #tpu.dot_dimension_numbers<[1], [0], [0], [1], [0, 0, 1, 1], [], []>} : vector<24x128xf32>, vector<128x128xf32>, vector<24x128xf32> -> vector<24x128xf32>
      %c0_7 = arith.constant 0 : index
      %c0_8 = arith.constant 0 : index
      %c0_9 = arith.constant 0 : index
      %22 = vector.load %arg5[%c0_7, %c0_8, %c0_9] : memref<1x3x128xf32, #tpu.memory_space<vmem>>, vector<1x3x128xf32>
      %23 = vector.shape_cast %22 : vector<1x3x128xf32> to vector<3x128xf32>
      %24 = vector.extract_strided_slice %23 {offsets = [0, 0], sizes = [1, 128], strides = [1, 1]} : vector<3x128xf32> to vector<1x128xf32>
      %25 = vector.extract_strided_slice %21 {offsets = [0, 0], sizes = [8, 128], strides = [1, 1]} : vector<24x128xf32> to vector<8x128xf32>
      %26 = vector.broadcast %24 : vector<1x128xf32> to vector<8x128xf32>
      %27 = arith.mulf %26, %25 : vector<8x128xf32>
      %28 = vector.extract_strided_slice %23 {offsets = [1, 0], sizes = [1, 128], strides = [1, 1]} : vector<3x128xf32> to vector<1x128xf32>
      %29 = vector.extract_strided_slice %21 {offsets = [8, 0], sizes = [8, 128], strides = [1, 1]} : vector<24x128xf32> to vector<8x128xf32>
      %30 = vector.broadcast %28 : vector<1x128xf32> to vector<8x128xf32>
      %31 = arith.mulf %30, %29 : vector<8x128xf32>
      %32 = arith.addf %27, %31 : vector<8x128xf32>
      %33 = vector.extract_strided_slice %23 {offsets = [2, 0], sizes = [1, 128], strides = [1, 1]} : vector<3x128xf32> to vector<1x128xf32>
      %34 = vector.extract_strided_slice %21 {offsets = [16, 0], sizes = [8, 128], strides = [1, 1]} : vector<24x128xf32> to vector<8x128xf32>
      %35 = vector.broadcast %33 : vector<1x128xf32> to vector<8x128xf32>
      %36 = arith.mulf %35, %34 : vector<8x128xf32>
      %37 = arith.addf %32, %36 : vector<8x128xf32>
      %c0_10 = arith.constant 0 : index
      %c0_11 = arith.constant 0 : index
      %c0_12 = arith.constant 0 : index
      %38 = vector.load %arg6[%c0_10, %c0_11, %c0_12] : memref<1x8x128xf32, #tpu.memory_space<vmem>>, vector<1x8x128xf32>
      %39 = vector.shape_cast %38 : vector<1x8x128xf32> to vector<8x128xf32>
      %40 = vector.shape_cast %37 : vector<8x128xf32> to vector<1x8x128xf32>
      tpu.vector_store %arg6[%c0_10, %c0_11, %c0_12], %40 {strides = array<i32>} : memref<1x8x128xf32, #tpu.memory_space<vmem>>, vector<1x8x128xf32>,
    } else {
    }
    return
  }
  func.func @transform_0(%arg0: i32, %arg1: i32, %arg2: memref<2x2xi32, #tpu.memory_space<smem>>) -> (i32, i32, i32) {
    %c0_i32 = arith.constant 0 : i32
    %c0_i32_0 = arith.constant 0 : i32
    %c0_i32_1 = arith.constant 0 : i32
    return %arg0, %c0_i32, %c0_i32_0 : i32, i32, i32
  }
  func.func @transform_1(%arg0: i32, %arg1: i32, %arg2: memref<2x2xi32, #tpu.memory_space<smem>>) -> (i32, i32, i32) {
    %c0_i32 = arith.constant 0 : i32
    %c0_i32_0 = arith.constant 0 : i32
    return %arg0, %c0_i32, %arg1 : i32, i32, i32
  }
  func.func @transform_2(%arg0: i32, %arg1: i32, %arg2: memref<2x2xi32, #tpu.memory_space<smem>>) -> (i32, i32, i32) {
    %c0_i32 = arith.constant 0 : i32
    %c0_i32_0 = arith.constant 0 : i32
    return %arg0, %c0_i32, %arg1 : i32, i32, i32
  }
  func.func @transform_3(%arg0: i32, %arg1: i32, %arg2: memref<2x2xi32, #tpu.memory_space<smem>>) -> (i32, i32, i32) {
    %c0_i32 = arith.constant 0 : i32
    %c0_i32_0 = arith.constant 0 : i32
    return %arg0, %c0_i32, %arg1 : i32, i32, i32
  }
}

</mosaic_0001>

<llo_original>
// kernel: tpu_custom_call.1
$region0: #{tpu_custom_call.1}
  #allocation0 [shape = 'u32[]', space=smem, size = 0x4, offset = 0x4, fixed_abs, tag = 'smem constant byte address 0x4 - core index']
  #allocation1 [shape = 'u32[144,128]{1,0:T(1,128)}', space=vmem, size = 0x12000, scoped, tag = 'internal scratch']
  #allocation2 [shape = 's32[1]{0}', space=sflag, size = 0x4, scoped, tag = 'scoped memory for tpu_custom_call.1']
  #allocation3 [shape = 'u8[1024]{0}', space=smem, size = 0x400, scoped, tag = 'prefetched SMEM operand 0']
  %s0 = inlined_call_operand.vmem [shape: s32[2,2], index: 0, kind: input, shape index: {}]
  %s1 = inlined_call_operand.hbm [shape: f32[2,24,128], index: 1, kind: input, shape index: {}]
  %s2 = inlined_call_operand.vmem [shape: s32[2,1,256], index: 2, kind: input, shape index: {}]
  %s3 = inlined_call_operand.vmem [shape: f32[2,3,256], index: 3, kind: input, shape index: {}]
  %s4 = inlined_call_operand.hbm [shape: f32[2,8,256], index: 4, kind: output, shape index: {}]
  %s5 = sld [smem:[#allocation0]]
  $region57: #{tpu_custom_call.1} parent=0
    _
  %s7 = ssub.s32 1, %s5
  %s8 = scalar_select 0, %s7, %s5
  %s9 = sshll.u32 %s0, 4
  %s10 = int_to_ptr.vmem [resolvable:$true] %s9
  %12 = dma.vmem_to_smem %s10, 32, [#allocation3], [#allocation2]
  %13 = dma.done [#allocation2], 32
  %14 = sfence
  $region1: #{tpu_custom_call.1} parent=0
    #allocation4 [shape = 'u8[24576]{0}', space=vmem, size = 0x6000, scoped, tag = 'input window, operand 1']
    #allocation5 [shape = 's32[2]{0}', space=sflag, size = 0x8, scoped, tag = 'scoped memory for tpu_custom_call.1']
    #allocation6 [shape = 's32[2]{0}', space=sflag, size = 0x8, scoped, tag = 'scoped memory for tpu_custom_call.1']
    #allocation7 [shape = 'u8[8192]{0}', space=vmem, size = 0x2000, scoped, tag = 'output window, operand 0']
    %15 = vsyncpa [#allocation5], 0
    %s16 = scalar_lea.sflag [#allocation5], 1
    %17 = vsyncpa %s16, 0
    %18 = vsyncpa [#allocation6], 0
    %s19 = scalar_lea.sflag [#allocation6], 1
    %20 = vsyncpa %s19, 0
    loop: start=0, step=1, limit=6
    $region2: #{tpu_custom_call.1} parent=1 // loop_pre_header
      _
    $region3: #{tpu_custom_call.1} parent=1 // loop_header
      %s22 = sphi 0, %s26
      %p23 = scmp.ge.s32.totalorder %s22, 6
      %s29 = sphi 0, %s41
      %s30 = sphi 0, %s37
      %s31 = sphi 0, %s29
      %s32 = sphi 0, %s30
      %s33 = sphi 0, %s31
      %s34 = sphi 0, %s32
      %s44 = sphi 0, %s46
      %s47 = sphi 0, %s44
      %s48 = sphi 0, %s47
      %s64 = sphi 0, %s48
      %s72 = sphi 0, %s74
      %s75 = sphi 0, %s72
      %s76 = sphi 0, %s75
      %s92 = sphi 0, %s76
      %s100 = sphi 0, %s102
      %s103 = sphi 0, %s100
      %s104 = sphi 0, %s103
      %s120 = sphi 0, %s104
      %s128 = sphi 0, %s130
      %s131 = sphi 0, %s128
      %s132 = sphi 0, %s131
      %s148 = sphi 0, %s132
    $region4: #{tpu_custom_call.1} parent=1 // loop_header_branch
      %25 = sbr.rel (%p23) target = $region8
    $region5: #{tpu_custom_call.1} parent=1 // loop_body
      %s27 = ssub.s32 %s22, 1
      %s28 = ssub.s32 %s22, 2
      %s35 = sadd.s32 1, %s30
      %p36 = scmp.ge.s32.totalorder %s35, 2
      %s37 = scalar_select %p36, 0, %s35
      %s38 = sadd.s32 1, %s29
      %s39 = scalar_select %p36, %s38, %s29
      %p40 = scmp.ge.s32.totalorder %s39, 2
      %s41 = scalar_select %p40, 0, %s39
      %s42 = ssub.s32 %s29, %s41
      %p43 = scmp.eq.s32.totalorder %s42, 0
      %s45 = sadd.s32 %s44, 1
      %s46 = scalar_select %p43, %s44, %s45
      %p49 = pneg %p43
      %p50 = scmp.eq.s32.totalorder %s22, 3
      %p51 = por %p49, %p50
      %p52 = scmp.ne.s32.totalorder %s44, %s47
      %p53 = scmp.eq.s32.totalorder %s22, 0
      %p54 = por %p52, %p53
      %p55 = scmp.ne.s32.totalorder %s44, %s47
      %p56 = scmp.eq.s32.totalorder %s27, 3
      %p57 = por %p55, %p56
      %p58 = scmp.ne.s32.totalorder %s47, %s48
      %p59 = scmp.eq.s32.totalorder %s27, 0
      %p60 = por %p58, %p59
      %p61 = scmp.ne.s32.totalorder %s47, %s48
      %p62 = scmp.eq.s32.totalorder %s28, 3
      %p63 = por %p61, %p62
      %p65 = scmp.ne.s32.totalorder %s48, %s64
      %p66 = scmp.eq.s32.totalorder %s28, 0
      %p67 = por %p65, %p66
      %s68 = ssub.s32 %s29, %s41
      %s69 = ssub.s32 %s30, %s37
      %s70 = sor.u32 %s68, %s69
      %p71 = scmp.eq.s32.totalorder %s70, 0
      %s73 = sadd.s32 %s72, 1
      %s74 = scalar_select %p71, %s72, %s73
      %p77 = pneg %p71
      %p78 = scmp.eq.s32.totalorder %s22, 3
      %p79 = por %p77, %p78
      %p80 = scmp.ne.s32.totalorder %s72, %s75
      %p81 = scmp.eq.s32.totalorder %s22, 0
      %p82 = por %p80, %p81
      %p83 = scmp.ne.s32.totalorder %s72, %s75
      %p84 = scmp.eq.s32.totalorder %s27, 3
      %p85 = por %p83, %p84
      %p86 = scmp.ne.s32.totalorder %s75, %s76
      %p87 = scmp.eq.s32.totalorder %s27, 0
      %p88 = por %p86, %p87
      %p89 = scmp.ne.s32.totalorder %s75, %s76
      %p90 = scmp.eq.s32.totalorder %s28, 3
      %p91 = por %p89, %p90
      %p93 = scmp.ne.s32.totalorder %s76, %s92
      %p94 = scmp.eq.s32.totalorder %s28, 0
      %p95 = por %p93, %p94
      %s96 = ssub.s32 %s29, %s41
      %s97 = ssub.s32 %s30, %s37
      %s98 = sor.u32 %s96, %s97
      %p99 = scmp.eq.s32.totalorder %s98, 0
      %s101 = sadd.s32 %s100, 1
      %s102 = scalar_select %p99, %s100, %s101
      %p105 = pneg %p99
      %p106 = scmp.eq.s32.totalorder %s22, 3
      %p107 = por %p105, %p106
      %p108 = scmp.ne.s32.totalorder %s100, %s103
      %p109 = scmp.eq.s32.totalorder %s22, 0
      %p110 = por %p108, %p109
      %p111 = scmp.ne.s32.totalorder %s100, %s103
      %p112 = scmp.eq.s32.totalorder %s27, 3
      %p113 = por %p111, %p112
      %p114 = scmp.ne.s32.totalorder %s103, %s104
      %p115 = scmp.eq.s32.totalorder %s27, 0
      %p116 = por %p114, %p115
      %p117 = scmp.ne.s32.totalorder %s103, %s104
      %p118 = scmp.eq.s32.totalorder %s28, 3
      %p119 = por %p117, %p118
      %p121 = scmp.ne.s32.totalorder %s104, %s120
      %p122 = scmp.eq.s32.totalorder %s28, 0
      %p123 = por %p121, %p122
      %s124 = ssub.s32 %s29, %s41
      %s125 = ssub.s32 %s30, %s37
      %s126 = sor.u32 %s124, %s125
      %p127 = scmp.eq.s32.totalorder %s126, 0
      %s129 = sadd.s32 %s128, 1
      %s130 = scalar_select %p127, %s128, %s129
      %p133 = pneg %p127
      %p134 = scmp.eq.s32.totalorder %s22, 3
      %p135 = por %p133, %p134
      %p136 = scmp.ne.s32.totalorder %s128, %s131
      %p137 = scmp.eq.s32.totalorder %s22, 0
      %p138 = por %p136, %p137
      %p139 = scmp.ne.s32.totalorder %s128, %s131
      %p140 = scmp.eq.s32.totalorder %s27, 3
      %p141 = por %p139, %p140
      %p142 = scmp.ne.s32.totalorder %s131, %s132
      %p143 = scmp.eq.s32.totalorder %s27, 0
      %p144 = por %p142, %p143
      %p145 = scmp.ne.s32.totalorder %s131, %s132
      %p146 = scmp.eq.s32.totalorder %s28, 3
      %p147 = por %p145, %p146
      %p149 = scmp.ne.s32.totalorder %s132, %s148
      %p150 = scmp.eq.s32.totalorder %s28, 0
      %p151 = por %p149, %p150
      %p152 = scmp.le.s32.totalorder 1, %s22
      %p153 = scmp.lt.s32.totalorder %s22, 5
      %p154 = pnand %p152, %p153
      %p155 = pneg %p154
      // Predicated region
      $region9: #{tpu_custom_call.1} parent=5 // pred_check
        _
      $region10: #{tpu_custom_call.1} parent=5 // pred_check_branch
        %157 = sbr.rel (%p154) target = $region12
      $region11: #{tpu_custom_call.1} parent=5 // pred_region
        %s158 = ssub.s32 %s22, 1
      $region12: #{tpu_custom_call.1} parent=5 // pred_fallthru
        _
      %p159 = scmp.lt.s32.totalorder %s22, 4
      // Predicated region
      $region13: #{tpu_custom_call.1} parent=5 // pred_check
        %p160 = pneg %p159
      $region14: #{tpu_custom_call.1} parent=5 // pred_check_branch
        %162 = sbr.rel (%p160) target = $region16
      $region15: #{tpu_custom_call.1} parent=5 // pred_region
        // Predicated region
        $region17: #{tpu_custom_call.1} parent=15 // pred_check
          %p163 = pneg %p54
        $region18: #{tpu_custom_call.1} parent=15 // pred_check_branch
          %165 = sbr.rel (%p163) target = $region20
        $region19: #{tpu_custom_call.1} parent=15 // pred_region
          %s166 = sand.u32 %s44, 1
          %s167 = scalar_lea.sflag [#allocation5], %s166
          %s168 = sand.u32 %s44, 1
          %s169 = smul.addr %s168, 24
          %s170 = scalar_lea.vmem [#allocation4], %s169
          %s172 = ssub.s32 384, 384
          %173 = vsyncadd %s167, %s172
          %s174 = smul.addr %s29, 3
          %s175 = smul.addr %s174, 128
          %s176 = scalar_lea.hbm %s1, %s175
          %s177 = sshll.u32 %s170, 4
          %s178 = int_to_ptr.vmem [resolvable:$true] %s177
          %183 = dma.hbm_to_vmem [thread:$0]  %s176, 384, %s178, %s167, 128, 128, 8
        $region20: #{tpu_custom_call.1} parent=15 // pred_fallthru
          _
        // Predicated region
        $region21: #{tpu_custom_call.1} parent=15 // pred_check
          %p184 = pneg %p82
        $region22: #{tpu_custom_call.1} parent=15 // pred_check_branch
          %186 = sbr.rel (%p184) target = $region24
        $region23: #{tpu_custom_call.1} parent=15 // pred_region
          %p187 = scmp.lt.s32.totalorder %s29, 1
          %s188 = scalar_select %p187, %s29, 1
          %p189 = scmp.lt.s32.totalorder %s30, 1
          %s190 = scalar_select %p189, %s30, 1
          %s191 = smul.addr %s188, 2
          %s192 = sadd.s32 %s190, %s191
          %s193 = scalar_lea.vmem %s2, %s192
        $region24: #{tpu_custom_call.1} parent=15 // pred_fallthru
          _
        // Predicated region
        $region25: #{tpu_custom_call.1} parent=15 // pred_check
          %p194 = pneg %p110
        $region26: #{tpu_custom_call.1} parent=15 // pred_check_branch
          %196 = sbr.rel (%p194) target = $region28
        $region27: #{tpu_custom_call.1} parent=15 // pred_region
          %p197 = scmp.lt.s32.totalorder %s29, 1
          %s198 = scalar_select %p197, %s29, 1
          %p199 = scmp.lt.s32.totalorder %s30, 1
          %s200 = scalar_select %p199, %s30, 1
          %s201 = smul.addr %s198, 2
          %s202 = sadd.s32 %s200, %s201
          %s203 = smul.addr %s202, 4
          %s204 = scalar_lea.vmem %s3, %s203
        $region28: #{tpu_custom_call.1} parent=15 // pred_fallthru
          _
      $region16: #{tpu_custom_call.1} parent=5 // pred_fallthru
        _
      %p205 = scmp.le.s32.totalorder 1, %s22
      %p206 = scmp.lt.s32.totalorder %s22, 5
      %p207 = pnand %p205, %p206
      %p208 = pneg %p207
      // Predicated region
      $region29: #{tpu_custom_call.1} parent=5 // pred_check
        _
      $region30: #{tpu_custom_call.1} parent=5 // pred_check_branch
        %210 = sbr.rel (%p207) target = $region32
      $region31: #{tpu_custom_call.1} parent=5 // pred_region
        %s211 = ssub.s32 %s22, 1
        %s212 = sand.u32 %s47, 1
        %s213 = scalar_lea.sflag [#allocation5], %s212
        %s214 = sand.u32 %s47, 1
        %s215 = smul.addr %s214, 24
        %s216 = scalar_lea.vmem [#allocation4], %s215
        // Predicated region
        $region33: #{tpu_custom_call.1} parent=31 // pred_check
          %p217 = pneg %p60
        $region34: #{tpu_custom_call.1} parent=31 // pred_check_branch
          %219 = sbr.rel (%p217) target = $region36
        $region35: #{tpu_custom_call.1} parent=31 // pred_region
          %220 = dma.done %s213, 384
        $region36: #{tpu_custom_call.1} parent=31 // pred_fallthru
          _
        %s221 = sand.u32 %s47, 1
        %s222 = scalar_lea.sflag [#allocation5], %s221
        %s223 = sand.u32 %s47, 1
        %s224 = smul.addr %s223, 24
        %s225 = scalar_lea.vmem [#allocation4], %s224
        %p226 = pneg %p60
        %p227 = pneg %p57
        %p228 = scmp.lt.s32.totalorder %s31, 1
        %s229 = scalar_select %p228, %s31, 1
        %p230 = scmp.lt.s32.totalorder %s32, 1
        %s231 = scalar_select %p230, %s32, 1
        %s232 = smul.addr %s229, 2
        %s233 = sadd.s32 %s231, %s232
        %s234 = scalar_lea.vmem %s2, %s233
        %p235 = pneg %p88
        %p236 = pneg %p85
        %p237 = scmp.lt.s32.totalorder %s31, 1
        %s238 = scalar_select %p237, %s31, 1
        %p239 = scmp.lt.s32.totalorder %s32, 1
        %s240 = scalar_select %p239, %s32, 1
        %s241 = smul.addr %s238, 2
        %s242 = sadd.s32 %s240, %s241
        %s243 = smul.addr %s242, 4
        %s244 = scalar_lea.vmem %s3, %s243
        %p245 = pneg %p116
        %p246 = pneg %p113
        %p247 = pneg %p144
        %p248 = pneg %p141
        %s249 = sand.u32 %s131, 1
        %s250 = scalar_lea.sflag [#allocation6], %s249
        %s251 = sand.u32 %s131, 1
        %s252 = smul.addr %s251, 8
        %s253 = scalar_lea.vmem [#allocation7], %s252
        %p254 = scmp.lt.s32.totalorder %s31, 1
        %s255 = scalar_select %p254, %s31, 1
        %p256 = scmp.lt.s32.totalorder %s32, 1
        %s257 = scalar_select %p256, %s32, 1
        %s258 = smul.addr %s255, 2
        %s259 = sadd.s32 %s257, %s258
        %s260 = scalar_lea.vmem %s2, %s259
        %p261 = scmp.lt.s32.totalorder %s31, 1
        %s262 = scalar_select %p261, %s31, 1
        %p263 = scmp.lt.s32.totalorder %s32, 1
        %s264 = scalar_select %p263, %s32, 1
        %s265 = smul.addr %s262, 2
        %s266 = sadd.s32 %s264, %s265
        %s267 = smul.addr %s266, 4
        %s268 = scalar_lea.vmem %s3, %s267
        %s269 = sshra.s32 %s32, 7
        %s270 = sand.u32 %s32, 127
        %s271 = sadd.s32 %s269, %s31
        %s272 = smul.u32 %s271, 128
        %s273 = sshra.s32 %s32, 7
        %s274 = sand.u32 %s32, 127
        %s275 = sadd.s32 %s272, %s274
        %s276 = sld [smem:[#allocation3 + %s275]]
        %p277 = scmp.ne.s32.totalorder %s276, 0
        %p278 = scmp.eq.s32.totalorder %s276, 0
        // Predicated region
        $region37: #{tpu_custom_call.1} parent=31 // pred_check
          %p279 = pneg %p278
        $region38: #{tpu_custom_call.1} parent=31 // pred_check_branch
          %281 = sbr.rel (%p279) target = $region40
        $region39: #{tpu_custom_call.1} parent=31 // pred_region
          %282 = vst [vmem:[%s253] sm:$0xff] 0.0
        $region40: #{tpu_custom_call.1} parent=31 // pred_fallthru
          _
        // Predicated region
        $region41: #{tpu_custom_call.1} parent=31 // pred_check
          %p283 = pneg %p277
        $region42: #{tpu_custom_call.1} parent=31 // pred_check_branch
          %285 = sbr.rel (%p283) target = $region44
        $region43: #{tpu_custom_call.1} parent=31 // pred_region
          %v286 = vld [vmem:[%s260] sm:$0x1]
          %s287 = smul.u32 %s31, 64
          %v288 = vstv %s287
          %v289 = vsub.s32 %v286, %v288
          %v290 = vlaneseq
          %v291 = vshrl.u32 %v290, 7
          %v292 = vadd.s32 %v291, 8
          %v293 = vadd.s32 %v291, 16
          %v294 = vadd.s32 %v291, 24
          %v295 = vadd.s32 %v291, 32
          %v296 = vadd.s32 %v291, 40
          %v297 = vadd.s32 %v291, 48
          %v298 = vadd.s32 %v291, 56
          %v299 = vadd.s32 %v291, 64
          %v300 = vadd.s32 %v291, 72
          %v301 = vadd.s32 %v291, 80
          %v302 = vadd.s32 %v291, 88
          %v303 = vadd.s32 %v291, 96
          %v304 = vadd.s32 %v291, 104
          %v305 = vadd.s32 %v291, 112
          %v306 = vadd.s32 %v291, 120
          %v307 = vlaneseq
          %v308 = vshrl.u32 %v307, 7
          %v309 = vsub.s32 0, %v308
          %v310 = vrot.slane %v289, %v309
          %vm311 = vcmp.eq.s32.totalorder %v310, %v291
          %vm312 = vcmp.eq.s32.totalorder %v310, %v292
          %vm313 = vcmp.eq.s32.totalorder %v310, %v293
          %vm314 = vcmp.eq.s32.totalorder %v310, %v294
          %vm315 = vcmp.eq.s32.totalorder %v310, %v295
          %vm316 = vcmp.eq.s32.totalorder %v310, %v296
          %vm317 = vcmp.eq.s32.totalorder %v310, %v297
          %vm318 = vcmp.eq.s32.totalorder %v310, %v298
          %vm319 = vcmp.eq.s32.totalorder %v310, %v299
          %vm320 = vcmp.eq.s32.totalorder %v310, %v300
          %vm321 = vcmp.eq.s32.totalorder %v310, %v301
          %vm322 = vcmp.eq.s32.totalorder %v310, %v302
          %vm323 = vcmp.eq.s32.totalorder %v310, %v303
          %vm324 = vcmp.eq.s32.totalorder %v310, %v304
          %vm325 = vcmp.eq.s32.totalorder %v310, %v305
          %vm326 = vcmp.eq.s32.totalorder %v310, %v306
          %v327 = vsel %vm311, 1, 0
          %v328 = vsel %vm312, 1, 0
          %v329 = vsel %vm313, 1, 0
          %v330 = vsel %vm314, 1, 0
          %v331 = vsel %vm315, 1, 0
          %v332 = vsel %vm316, 1, 0
          %v333 = vsel %vm317, 1, 0
          %v334 = vsel %vm318, 1, 0
          %v335 = vsel %vm319, 1, 0
          %v336 = vsel %vm320, 1, 0
          %v337 = vsel %vm321, 1, 0
          %v338 = vsel %vm322, 1, 0
          %v339 = vsel %vm323, 1, 0
          %v340 = vsel %vm324, 1, 0
          %v341 = vsel %vm325, 1, 0
          %v342 = vsel %vm326, 1, 0
          %v343 = vcvt.s32.f32 %v327
          %v344 = vcvt.s32.f32 %v328
          %v345 = vcvt.s32.f32 %v329
          %v346 = vcvt.s32.f32 %v330
          %v347 = vcvt.s32.f32 %v331
          %v348 = vcvt.s32.f32 %v332
          %v349 = vcvt.s32.f32 %v333
          %v350 = vcvt.s32.f32 %v334
          %v351 = vcvt.s32.f32 %v335
          %v352 = vcvt.s32.f32 %v336
          %v353 = vcvt.s32.f32 %v337
          %v354 = vcvt.s32.f32 %v338
          %v355 = vcvt.s32.f32 %v339
          %v356 = vcvt.s32.f32 %v340
          %v357 = vcvt.s32.f32 %v341
          %v358 = vcvt.s32.f32 %v342
          %v359 = vld [vmem:[%s216] sm:$0xff]
          %v360 = vld [vmem:[%s216 + $0x8] sm:$0xff]
          %v361 = vld [vmem:[%s216 + $0x10] sm:$0xff]
          %362 = vmatprep.subr.mxu0 0.0
          %363 = vmatpush1.msra.mxu0 %v343
          %364 = vmatprep.subr.mxu0 0.0
          %365 = vmatpush1.msra.mxu0 %v344
          %366 = vmatprep.subr.mxu0 0.0
          %367 = vmatpush1.msra.mxu0 %v345
          %368 = vmatprep.subr.mxu0 0.0
          %369 = vmatpush1.msra.mxu0 %v346
          %370 = vmatprep.subr.mxu0 0.0
          %371 = vmatpush1.msra.mxu0 %v347
          %372 = vmatprep.subr.mxu0 0.0
          %373 = vmatpush1.msra.mxu0 %v348
          %374 = vmatprep.subr.mxu0 0.0
          %375 = vmatpush1.msra.mxu0 %v349
          %376 = vmatprep.subr.mxu0 0.0
          %377 = vmatpush1.msra.mxu0 %v350
          %378 = vmatprep.subr.mxu0 0.0
          %379 = vmatpush1.msra.mxu0 %v351
          %380 = vmatprep.subr.mxu0 0.0
          %381 = vmatpush1.msra.mxu0 %v352
          %382 = vmatprep.subr.mxu0 0.0
          %383 = vmatpush1.msra.mxu0 %v353
          %384 = vmatprep.subr.mxu0 0.0
          %385 = vmatpush1.msra.mxu0 %v354
          %386 = vmatprep.subr.mxu0 0.0
          %387 = vmatpush1.msra.mxu0 %v355
          %388 = vmatprep.subr.mxu0 0.0
          %389 = vmatpush1.msra.mxu0 %v356
          %390 = vmatprep.subr.mxu0 0.0
          %391 = vmatpush1.msra.mxu0 %v357
          %392 = vmatprep.subr.mxu0 0.0
          %393 = vmatpush1.msra.mxu0 %v358
          %394 = vmatprep.subr.mxu0 0.0
          %395 = vmatpush1.msra.mxu0 0.0
          %396 = vmatprep.subr.mxu0 0.0
          %397 = vmatpush1.msra.mxu0 0.0
          %398 = vmatprep.subr.mxu0 0.0
          %399 = vmatpush1.msra.mxu0 0.0
          %400 = vmatprep.subr.mxu0 0.0
          %401 = vmatpush1.msra.mxu0 0.0
          %402 = vmatprep.subr.mxu0 0.0
          %403 = vmatpush1.msra.mxu0 0.0
          %404 = vmatprep.subr.mxu0 0.0
          %405 = vmatpush1.msra.mxu0 0.0
          %406 = vmatprep.subr.mxu0 0.0
          %407 = vmatpush1.msra.mxu0 0.0
          %408 = vmatprep.subr.mxu0 0.0
          %409 = vmatpush1.msra.mxu0 0.0
          %410 = vmatprep.subr.mxu0 0.0
          %411 = vmatpush1.msra.mxu0 0.0
          %412 = vmatprep.subr.mxu0 0.0
          %413 = vmatpush1.msra.mxu0 0.0
          %414 = vmatprep.subr.mxu0 0.0
          %415 = vmatpush1.msra.mxu0 0.0
          %416 = vmatprep.subr.mxu0 0.0
          %417 = vmatpush1.msra.mxu0 0.0
          %418 = vmatprep.subr.mxu0 0.0
          %419 = vmatpush1.msra.mxu0 0.0
          %420 = vmatprep.subr.mxu0 0.0
          %421 = vmatpush1.msra.mxu0 0.0
          %422 = vmatprep.subr.mxu0 0.0
          %423 = vmatpush1.msra.mxu0 0.0
          %424 = vmatprep.subr.mxu0 0.0
          %425 = vmatpush1.msra.mxu0 0.0
          %426 = vmatprep.mubr.f32.mxu0 0.0
          %427 = vmatmul.mubr.f32.gmra.mrb[0].mxu0 %v359
          %v428 = vpop.f32.mrb[0].mxu0
          %v429 = vadd.f32 0.0, %v428
          %v430 = vpop.f32.mrb[0].mxu0
          %431 = vmatprep.mubr.f32.mxu0 0.0
          %432 = vmatmul.mubr.f32.gmra.mrb[0].mxu0 %v360
          %v433 = vpop.f32.mrb[0].mxu0
          %v434 = vadd.f32 0.0, %v433
          %v435 = vpop.f32.mrb[0].mxu0
          %436 = vmatprep.mubr.f32.mxu0 0.0
          %437 = vmatmul.mubr.f32.gmra.mrb[0].mxu0 %v361
          %v438 = vpop.f32.mrb[0].mxu0
          %v439 = vadd.f32 0.0, %v438
          %v440 = vpop.f32.mrb[0].mxu0
          %441 = vdwg.mxu0
          %v442 = vld [vmem:[%s268] sm:$0x7]
          %v443 = vlaneseq
          %v444 = vshrl.u32 %v443, 7
          %v445 = vsub.s32 0, %v444
          %v446 = vrot.slane %v442, %v445
          %v447 = vmul.f32 %v446, %v429
          %v448 = vlaneseq
          %v449 = vshrl.u32 %v448, 7
          %v450 = vsub.s32 1, %v449
          %v451 = vrot.slane %v442, %v450
          %v452 = vmul.f32 %v451, %v434
          %v453 = vadd.f32 %v447, %v452
          %v454 = vlaneseq
          %v455 = vshrl.u32 %v454, 7
          %v456 = vsub.s32 2, %v455
          %v457 = vrot.slane %v442, %v456
          %v458 = vmul.f32 %v457, %v439
          %v459 = vadd.f32 %v453, %v458
          %460 = vst [vmem:[%s253] sm:$0xff] %v459
        $region44: #{tpu_custom_call.1} parent=31 // pred_fallthru
          _
        %s461 = sand.u32 %s131, 1
        %s462 = scalar_lea.sflag [#allocation6], %s461
        %s463 = sand.u32 %s131, 1
        %s464 = smul.addr %s463, 8
        %s465 = scalar_lea.vmem [#allocation7], %s464
        // Predicated region
        $region45: #{tpu_custom_call.1} parent=31 // pred_check
          %p466 = pneg %p141
        $region46: #{tpu_custom_call.1} parent=31 // pred_check_branch
          %468 = sbr.rel (%p466) target = $region48
        $region47: #{tpu_custom_call.1} parent=31 // pred_region
          %s470 = ssub.s32 128, 128
          %471 = vsyncadd %s462, %s470
          %s472 = smul.addr %s31, 2
          %s473 = sadd.s32 %s32, %s472
          %s474 = smul.addr %s473, 128
          %s475 = scalar_lea.hbm %s4, %s474
          %s477 = sshll.u32 %s465, 4
          %s478 = int_to_ptr.vmem [resolvable:$true] %s477
          %480 = dma.vmem_to_hbm [thread:$0]  %s478, 128, %s475, %s462
        $region48: #{tpu_custom_call.1} parent=31 // pred_fallthru
          _
      $region32: #{tpu_custom_call.1} parent=5 // pred_fallthru
        _
      %p481 = scmp.le.s32.totalorder 2, %s22
      // Predicated region
      $region49: #{tpu_custom_call.1} parent=5 // pred_check
        %p482 = pneg %p481
      $region50: #{tpu_custom_call.1} parent=5 // pred_check_branch
        %484 = sbr.rel (%p482) target = $region52
      $region51: #{tpu_custom_call.1} parent=5 // pred_region
        %s485 = ssub.s32 %s22, 2
        // Predicated region
        $region53: #{tpu_custom_call.1} parent=51 // pred_check
          %p486 = pneg %p147
        $region54: #{tpu_custom_call.1} parent=51 // pred_check_branch
          %488 = sbr.rel (%p486) target = $region56
        $region55: #{tpu_custom_call.1} parent=51 // pred_region
          %s489 = sand.u32 %s132, 1
          %s490 = scalar_lea.sflag [#allocation6], %s489
          %s491 = sand.u32 %s132, 1
          %s492 = smul.addr %s491, 8
          %s493 = scalar_lea.vmem [#allocation7], %s492
          %494 = dma.done %s490, 128
        $region56: #{tpu_custom_call.1} parent=51 // pred_fallthru
          _
      $region52: #{tpu_custom_call.1} parent=5 // pred_fallthru
        _
    $region6: #{tpu_custom_call.1} parent=1 // loop_footer
      %s26 = sadd.s32 1, %s22
    $region7: #{tpu_custom_call.1} parent=1 // loop_footer_branch
      %21 = sbr.rel target = $region3
    $region8: #{tpu_custom_call.1} parent=1 // loop_exit
      _
    %495 = vsyncpa [#allocation5], 1
    %s496 = scalar_lea.sflag [#allocation5], 1
    %497 = vsyncpa %s496, 1
    %498 = vsyncpa [#allocation6], 1
    %s499 = scalar_lea.sflag [#allocation6], 1
    %500 = vsyncpa %s499, 1

</llo_original>
